<compile_context>
chip_gen: v5e
topology: v5e:2x2
jax: 0.10.0
libtpu: 0.0.40
codegen_flags: <defaults>
</compile_context>

<pallas_src>
import jax
import jax.numpy as jnp
from jax.experimental import pallas as pl
from jax.experimental.pallas import tpu as pltpu

EPS = 1e-5


def _round_up(n, m):
    return ((n + m - 1) // m) * m


# ----------------------------------------------------------------------------
# Parameter folding (eval-mode BatchNorm + Linear bias -> W', b'; pack smalls).
# ----------------------------------------------------------------------------
def fold_params(params):
    """Fold eval-mode BN into each Linear and pack small vectors into one array.

    Returns (ws, packed, widths):
      ws      : list of folded weight matrices, ws[i] has shape (in_i, out_i)
      packed  : (L+2, Wmax) f32 — rows 0..L-1 folded biases, row L = output
                weight row, row L+1 column 0 = output bias
      widths  : list of layer output widths
    """
    ws_f, bs_f = [], []
    for w, b, g, beta, m, v in zip(params["w"], params["b"], params["gamma"],
                                   params["beta"], params["mean"], params["var"]):
        scale = g * jax.lax.rsqrt(v + EPS)            # (1, H)
        ws_f.append(w * scale)                        # (in, H)
        bs_f.append((b - m) * scale + beta)           # (1, H)

    widths = [w.shape[1] for w in ws_f]
    wmax = max(widths)
    L = len(ws_f)

    packed = jnp.zeros((L + 2, wmax), jnp.float32)
    for i, b in enumerate(bs_f):
        packed = packed.at[i, :widths[i]].set(b[0])
    packed = packed.at[L, :widths[-1]].set(params["wo"][:, 0])   # output weight row
    packed = packed.at[L + 1, 0].set(params["bo"][0, 0])         # output bias
    return ws_f, packed, widths


# ----------------------------------------------------------------------------
# Kernel
# ----------------------------------------------------------------------------
def _make_kernel(nlayers, widths, compute_dtype):
    L = nlayers

    def kernel(x_ref, *rest):
        w_refs = rest[:L]
        packed_ref = rest[L]
        o_ref = rest[L + 1]

        # x arrives f32; narrow to the MXU dtype in-kernel (cheap VPU work,
        # avoids an extra HBM pass in the wrapper).
        h = x_ref[...].astype(compute_dtype)                  # (TB, D)
        for i in range(L):
            if i > 0:
                h = h.astype(compute_dtype)                   # MXU operands narrow
            z = jnp.dot(h, w_refs[i][...],
                        preferred_element_type=jnp.float32)   # (TB, H_i) f32 acc
            z = z + packed_ref[i:i + 1, :widths[i]]           # folded BN + bias
            h = jnp.tanh(z)                                   # f32 elementwise (EUP)
            # TODO(synk): training-mode dropout (p=0.2) not applied; eval semantics.

        # Output layer: N=1, so use VPU broadcast-multiply + lane reduce (no MXU).
        wo_row = packed_ref[L:L + 1, :widths[-1]]             # (1, H_last) f32
        bo = packed_ref[L + 1:L + 2, 0:1]                     # (1, 1)
        z = jnp.sum(h * wo_row, axis=-1, keepdims=True) + bo  # (TB, 1)
        o_ref[...] = jax.nn.sigmoid(z).astype(o_ref.dtype)

    return kernel


# ----------------------------------------------------------------------------
# Wrapper
# ----------------------------------------------------------------------------
def netpisarun2_forward(x, params, *, block_rows=2048, compute_dtype=jnp.bfloat16):
    """x: (B, D) float32. Returns (B, 1) float32 (eval-mode forward)."""
    B, D = x.shape
    ws, packed, widths = fold_params(params)
    L = len(ws)

    # Batch tile: biggest clean tile <= block_rows; pad B to a tile multiple.
    if B <= block_rows:
        TB = _round_up(max(B, 1), 8)
    else:
        TB = block_rows                      # multiple of 8 by construction
    B_pad = _round_up(B, TB)
    if B_pad != B:
        x = jnp.pad(x, ((0, B_pad - B), (0, 0)))

    x = x.astype(jnp.float32)                                  # kernel casts to bf16
    wsc = [w.astype(compute_dtype) for w in ws]                # one-time tiny casts

    kernel = _make_kernel(L, widths, compute_dtype)

    grid = (B_pad // TB,)
    in_specs = (
        [pl.BlockSpec((TB, D), lambda i: (i, 0))]                    # streamed x
        + [pl.BlockSpec(w.shape, lambda i: (0, 0)) for w in wsc]     # resident W
        + [pl.BlockSpec(packed.shape, lambda i: (0, 0))]             # resident smalls
    )
    out_specs = pl.BlockSpec((TB, 1), lambda i: (i, 0))

    dims = [D] + widths
    w_itemsize = jnp.dtype(compute_dtype).itemsize
    flops = 2 * B_pad * sum(a * b for a, b in zip(dims[:-1], dims[1:]))
    flops += 2 * B_pad * widths[-1]                                   # final reduce
    transcendentals = B_pad * (sum(widths) + 1)                       # tanh + sigmoid
    bytes_accessed = (
        B_pad * D * 4                                                 # x read (f32)
        + sum(w.size * w_itemsize for w in wsc)                       # weights (once)
        + packed.size * 4
        + B_pad * 4                                                   # output write
    )

    out = pl.pallas_call(
        kernel,
        out_shape=jax.ShapeDtypeStruct((B_pad, 1), jnp.float32),
        grid=grid,
        in_specs=in_specs,
        out_specs=out_specs,
        compiler_params=pltpu.CompilerParams(
            dimension_semantics=("parallel",),        # shard batch across TCs (v7x)
            vmem_limit_bytes=32 * 1024 * 1024,        # guardrail; safe on 64MiB v7x
        ),
        cost_estimate=pl.CostEstimate(
            flops=flops,
            transcendentals=transcendentals,
            bytes_accessed=bytes_accessed,
        ),
    )(x, *wsc, packed)
    return out[:B]


# ----------------------------------------------------------------------------
# Deterministic synthetic parameters (NetPisaRun2(name, input_dim, L, nnodes))
# ----------------------------------------------------------------------------
def make_params(key, input_dim, nnodes):
    L = len(nnodes)
    keys = jax.random.split(key, 2 * L + 2)
    ws, bs, gs, betas, ms, vs = [], [], [], [], [], []
    fan_in = input_dim
    ki = 0
    for h in nnodes:
        bound = 1.0 / (fan_in ** 0.5)   # torch nn.Linear default init range
        ws.append(jax.random.uniform(keys[ki], (fan_in, h), jnp.float32, -bound, bound))
        ki += 1
        bs.append(jax.random.uniform(keys[ki], (1, h), jnp.float32, -bound, bound))
        ki += 1
        idx = jnp.arange(h, dtype=jnp.float32)
        gs.append((1.0 + 0.1 * jnp.cos(idx)).reshape(1, h))
        betas.append((0.05 * jnp.sin(idx)).reshape(1, h))
        ms.append((0.01 * idx - 0.05).reshape(1, h))
        vs.append((1.0 + 0.02 * idx).reshape(1, h))
        fan_in = h
    bound = 1.0 / (fan_in ** 0.5)
    wo = jax.random.uniform(keys[ki], (fan_in, 1), jnp.float32, -bound, bound)
    ki += 1
    bo = jax.random.uniform(keys[ki], (1, 1), jnp.float32, -bound, bound)
    return dict(w=ws, b=bs, gamma=gs, beta=betas, mean=ms, var=vs, wo=wo, bo=bo)


# ----------------------------------------------------------------------------
# Pure-JAX references for sanity checking
# ----------------------------------------------------------------------------
def _reference_forward_f32(x, params):
    """Exact eval-mode module math in full f32 (no folding, no bf16)."""
    h = x
    for w, b, g, beta, m, v in zip(params["w"], params["b"], params["gamma"],
                                   params["beta"], params["mean"], params["var"]):
        z = h @ w + b
        z = g * (z - m) * jax.lax.rsqrt(v + EPS) + beta
        h = jnp.tanh(z)
    return jax.nn.sigmoid(h @ params["wo"] + params["bo"])


def _reference_forward_matched(x, params, compute_dtype=jnp.bfloat16):
    """Same folding + dtype scheme as the Pallas kernel (tight comparison)."""
    ws, packed, widths = fold_params(params)
    L = len(ws)
    h = x.astype(compute_dtype)
    for i in range(L):
        if i > 0:
            h = h.astype(compute_dtype)
        z = jnp.dot(h, ws[i].astype(compute_dtype),
                    preferred_element_type=jnp.float32)
        z = z + packed[i:i + 1, :widths[i]]
        h = jnp.tanh(z)
    wo_row = packed[L:L + 1, :widths[-1]]
    bo = packed[L + 1:L + 2, 0:1]
    z = jnp.sum(h * wo_row, axis=-1, keepdims=True) + bo
    return jax.nn.sigmoid(z)


if __name__ == "__main__":
    key = jax.random.PRNGKey(0)
    k_x, k_p, k_x2 = jax.random.split(key, 3)

    # NetPisaRun2("pisa", input_dim=24, nlayers=2, nnodes=[64, 32])
    input_dim, nnodes = 24, [64, 32]
    params = make_params(k_p, input_dim, nnodes)

    # Small batch: single padded block (10 -> 16 rows), grid=(1,).
    x_small = jax.random.normal(k_x, (10, input_dim), jnp.float32)
    out_small = jax.block_until_ready(netpisarun2_forward(x_small, params))
    assert out_small.shape == (10, 1)

    # Moderate batch exercising the multi-block pipelined grid: TB=64, grid=(3,).
    x_big = jax.random.normal(k_x2, (160, input_dim), jnp.float32)
    out_big = jax.block_until_ready(
        netpisarun2_forward(x_big, params, block_rows=64))
    assert out_big.shape == (160, 1)

    for x, out in ((x_small, out_small), (x_big, out_big)):
        ref_match = _reference_forward_matched(x, params)   # same math as kernel
        ref_f32 = _reference_forward_f32(x, params)         # full-precision module
        assert jnp.allclose(out, ref_match, atol=1e-4, rtol=1e-4)
        assert jnp.allclose(out, ref_f32, atol=5e-2, rtol=0.0)

    print("KERNEL_OK")
</pallas_src>

<mosaic_0001>
module attributes {stable_mosaic.version = 11 : i64} {
  func.func @kernel(%arg0: i32, %arg1: memref<16x24xf32, #tpu.memory_space<vmem>>, %arg2: memref<24x64xbf16, #tpu.memory_space<vmem>>, %arg3: memref<64x32xbf16, #tpu.memory_space<vmem>>, %arg4: memref<4x64xf32, #tpu.memory_space<vmem>>, %arg5: memref<16x1xf32, #tpu.memory_space<vmem>>) attributes {dimension_semantics = [#tpu.dimension_semantics<parallel>], iteration_bounds = array<i64: 1>, scalar_prefetch = 0 : i64, scratch_operands = 0 : i64, tpu.core_type = #tpu.core_type<tc>, window_params = [{transform_indices = @transform_0, window_bounds = array<i64: 16, 24>}, {pipeline_mode = #tpu.pipeline_mode<synchronous>, transform_indices = @transform_1, window_bounds = array<i64: 24, 64>}, {pipeline_mode = #tpu.pipeline_mode<synchronous>, transform_indices = @transform_2, window_bounds = array<i64: 64, 32>}, {pipeline_mode = #tpu.pipeline_mode<synchronous>, transform_indices = @transform_3, window_bounds = array<i64: 4, 64>}, {transform_indices = @transform_4, window_bounds = array<i64: 16, 1>}]} {
    %c0 = arith.constant 0 : index
    %c0_0 = arith.constant 0 : index
    %0 = vector.load %arg1[%c0, %c0_0] : memref<16x24xf32, #tpu.memory_space<vmem>>, vector<16x24xf32>
    %1 = arith.truncf %0 : vector<16x24xf32> to vector<16x24xbf16>
    %c0_1 = arith.constant 0 : index
    %c0_2 = arith.constant 0 : index
    %2 = vector.load %arg2[%c0_1, %c0_2] : memref<24x64xbf16, #tpu.memory_space<vmem>>, vector<24x64xbf16>
    %cst = arith.constant dense<0.000000e+00> : vector<16x64xf32>
    %3 = tpu.matmul %1, %2, %cst {dimension_numbers = #tpu.dot_dimension_numbers<[1], [0], [0], [1], [0, 0, 1, 1], [], []>} : vector<16x24xbf16>, vector<24x64xbf16>, vector<16x64xf32> -> vector<16x64xf32>
    %c0_3 = arith.constant 0 : index
    %c0_4 = arith.constant 0 : index
    %4 = vector.load %arg4[%c0_3, %c0_4] : memref<4x64xf32, #tpu.memory_space<vmem>>, vector<1x64xf32>
    %5 = vector.broadcast %4 : vector<1x64xf32> to vector<16x64xf32>
    %6 = arith.addf %3, %5 : vector<16x64xf32>
    %7 = math.tanh %6 : vector<16x64xf32>
    %8 = arith.truncf %7 : vector<16x64xf32> to vector<16x64xbf16>
    %c0_5 = arith.constant 0 : index
    %c0_6 = arith.constant 0 : index
    %9 = vector.load %arg3[%c0_5, %c0_6] : memref<64x32xbf16, #tpu.memory_space<vmem>>, vector<64x32xbf16>
    %cst_7 = arith.constant dense<0.000000e+00> : vector<16x32xf32>
    %10 = tpu.matmul %8, %9, %cst_7 {dimension_numbers = #tpu.dot_dimension_numbers<[1], [0], [0], [1], [0, 0, 1, 1], [], []>} : vector<16x64xbf16>, vector<64x32xbf16>, vector<16x32xf32> -> vector<16x32xf32>
    %c1 = arith.constant 1 : index
    %c0_8 = arith.constant 0 : index
    %11 = vector.load %arg4[%c1, %c0_8] : memref<4x64xf32, #tpu.memory_space<vmem>>, vector<1x32xf32>
    %12 = vector.broadcast %11 : vector<1x32xf32> to vector<16x32xf32>
    %13 = arith.addf %10, %12 : vector<16x32xf32>
    %14 = math.tanh %13 : vector<16x32xf32>
    %c2 = arith.constant 2 : index
    %c0_9 = arith.constant 0 : index
    %15 = vector.load %arg4[%c2, %c0_9] : memref<4x64xf32, #tpu.memory_space<vmem>>, vector<1x32xf32>
    %c3 = arith.constant 3 : index
    %c0_10 = arith.constant 0 : index
    %16 = vector.load %arg4[%c3, %c0_10] : memref<4x64xf32, #tpu.memory_space<vmem>>, vector<1x1xf32>
    %17 = vector.broadcast %15 : vector<1x32xf32> to vector<16x32xf32>
    %18 = arith.mulf %14, %17 : vector<16x32xf32>
    %cst_11 = arith.constant dense<0.000000e+00> : vector<16xf32>
    %19 = vector.multi_reduction <add>, %18, %cst_11 [1] : vector<16x32xf32> to vector<16xf32>
    %20 = vector.shape_cast %19 : vector<16xf32> to vector<16x1xf32>
    %21 = vector.broadcast %16 : vector<1x1xf32> to vector<16x1xf32>
    %22 = arith.addf %20, %21 : vector<16x1xf32>
    %23 = arith.negf %22 : vector<16x1xf32>
    %24 = math.exp %23 : vector<16x1xf32>
    %cst_12 = arith.constant 1.000000e+00 : f32
    %25 = vector.broadcast %cst_12 : f32 to vector<16x1xf32>
    %26 = arith.addf %25, %24 : vector<16x1xf32>
    %27 = arith.divf %25, %26 : vector<16x1xf32>
    %c0_13 = arith.constant 0 : index
    %c0_14 = arith.constant 0 : index
    %28 = vector.load %arg5[%c0_13, %c0_14] : memref<16x1xf32, #tpu.memory_space<vmem>>, vector<16x1xf32>
    tpu.vector_store %arg5[%c0_13, %c0_14], %27 {strides = array<i32>} : memref<16x1xf32, #tpu.memory_space<vmem>>, vector<16x1xf32>,
    return
  }
  func.func @transform_0(%arg0: i32) -> (i32, i32) {
    %c0_i32 = arith.constant 0 : i32
    %c0_i32_0 = arith.constant 0 : i32
    return %arg0, %c0_i32 : i32, i32
  }
  func.func @transform_1(%arg0: i32) -> (i32, i32) {
    %c0_i32 = arith.constant 0 : i32
    %c0_i32_0 = arith.constant 0 : i32
    %c0_i32_1 = arith.constant 0 : i32
    return %c0_i32, %c0_i32_0 : i32, i32
  }
  func.func @transform_2(%arg0: i32) -> (i32, i32) {
    %c0_i32 = arith.constant 0 : i32
    %c0_i32_0 = arith.constant 0 : i32
    %c0_i32_1 = arith.constant 0 : i32
    return %c0_i32, %c0_i32_0 : i32, i32
  }
  func.func @transform_3(%arg0: i32) -> (i32, i32) {
    %c0_i32 = arith.constant 0 : i32
    %c0_i32_0 = arith.constant 0 : i32
    %c0_i32_1 = arith.constant 0 : i32
    return %c0_i32, %c0_i32_0 : i32, i32
  }
  func.func @transform_4(%arg0: i32) -> (i32, i32) {
    %c0_i32 = arith.constant 0 : i32
    %c0_i32_0 = arith.constant 0 : i32
    return %arg0, %c0_i32 : i32, i32
  }
}

</mosaic_0001>

<llo_original>
// kernel: tpu_custom_call.1
$region0: #{tpu_custom_call.1}
  #allocation0 [shape = 'u32[]', space=smem, size = 0x4, offset = 0x4, fixed_abs, tag = 'smem constant byte address 0x4 - core index']
  #allocation1 [shape = 'u32[72,128]{1,0:T(1,128)}', space=vmem, size = 0x9000, scoped, tag = 'internal scratch']
  %s0 = inlined_call_operand.vmem [shape: f32[16,24], index: 0, kind: input, shape index: {}]
  %s1 = inlined_call_operand.vmem [shape: bf16[24,64], index: 1, kind: input, shape index: {}]
  %s2 = inlined_call_operand.vmem [shape: bf16[64,32], index: 2, kind: input, shape index: {}]
  %s3 = inlined_call_operand.vmem [shape: f32[4,64], index: 3, kind: input, shape index: {}]
  %s4 = inlined_call_operand.vmem [shape: f32[16,1], index: 4, kind: output, shape index: {}]
  %s5 = sld [smem:[#allocation0]]
  $region26: #{tpu_custom_call.1} parent=0
    _
  %s7 = ssub.s32 1, %s5
  %s8 = scalar_select 0, %s7, %s5
  // Predicated region
  $region2: #{tpu_custom_call.1} parent=0 // pred_check
    _
  $region3: #{tpu_custom_call.1} parent=0 // pred_check_branch
    %10 = sbr.rel (0) target = $region5
  $region4: #{tpu_custom_call.1} parent=0 // pred_region
    _
  $region5: #{tpu_custom_call.1} parent=0 // pred_fallthru
    _
  // Predicated region
  $region6: #{tpu_custom_call.1} parent=0 // pred_check
    _
  $region7: #{tpu_custom_call.1} parent=0 // pred_check_branch
    %12 = sbr.rel (0) target = $region9
  $region8: #{tpu_custom_call.1} parent=0 // pred_region
    _
  $region9: #{tpu_custom_call.1} parent=0 // pred_fallthru
    _
  // Predicated region
  $region10: #{tpu_custom_call.1} parent=0 // pred_check
    _
  $region11: #{tpu_custom_call.1} parent=0 // pred_check_branch
    %14 = sbr.rel (0) target = $region13
  $region12: #{tpu_custom_call.1} parent=0 // pred_region
    _
  $region13: #{tpu_custom_call.1} parent=0 // pred_fallthru
    _
  // Predicated region
  $region14: #{tpu_custom_call.1} parent=0 // pred_check
    _
  $region15: #{tpu_custom_call.1} parent=0 // pred_check_branch
    %16 = sbr.rel (0) target = $region17
  $region16: #{tpu_custom_call.1} parent=0 // pred_region
    _
  $region17: #{tpu_custom_call.1} parent=0 // pred_fallthru
    _
  %v18 = vld [vmem:[%s0] sm:$0xff]
  %v19 = vld [vmem:[%s0 + $0x8] sm:$0xff]
  %v20 = vpack.c.bf16 %v19, %v18
  %v21 = vld [vmem:[%s1] sm:$0xf]
  %v22 = vld [vmem:[%s1 + $0x4] sm:$0xf]
  %v23 = vld [vmem:[%s1 + $0x8] sm:$0xf]
  %v24 = vld [vmem:[%s3] sm:$0x1]
  %v25 = vperm.slane %v24, 0
  %v29 = vunpack.c.l.b16 %v21
  %v30 = vunpack.c.l.b16 %v22
  %v31 = vunpack.c.l.b16 %v23
  %v32 = vpack.c.b16 %v30, %v29
  %v33 = vpack.c.b16 %v31, %v31
  %vm35 = vcmask 195584
  %v37 = vsel %vm35, %v20, 0
  %vm39 = vcmask 1043456
  %v41 = vsel %vm39, %v33, 0
  %43 = vmatpush.bf16.msra.mxu0 0
  %44 = vmatpush.bf16.msra.mxu0 0
  %45 = vmatpush.bf16.msra.mxu0 0
  %46 = vmatpush.bf16.msra.mxu0 0
  %47 = vmatpush.bf16.msra.mxu0 0
  %48 = vmatpush.bf16.msra.mxu0 0
  %49 = vmatpush.bf16.msra.mxu0 %v41
  %50 = vmatpush.bf16.msra.mxu0 %v32
  %51 = vmatmul.bf16.gmra.mxu0 %v37
  %v52 = vpop.f32.mrf.mxu0
  %v53 = vadd.f32 %v25, %v52
  %v54 = vpop.f32.mrf.mxu0
  %v55 = vadd.f32 %v25, %v54
  %56 = vdwg.mxu0
  %v57 = vtanh.pop %v53
  %v58 = vtanh.pop %v55
  %v59 = vpack.c.bf16 %v58, %v57
  %v60 = vld [vmem:[%s2] sm:$0xf]
  %v61 = vld [vmem:[%s2 + $0x4] sm:$0xf]
  %v62 = vld [vmem:[%s2 + $0x8] sm:$0xf]
  %v63 = vld [vmem:[%s2 + $0xc] sm:$0xf]
  %v64 = vld [vmem:[%s2 + $0x10] sm:$0xf]
  %v65 = vld [vmem:[%s2 + $0x14] sm:$0xf]
  %v66 = vld [vmem:[%s2 + $0x18] sm:$0xf]
  %v67 = vld [vmem:[%s2 + $0x1c] sm:$0xf]
  %v68 = vld [vmem:[%s3 + $0x1] sm:$0x1]
  %v69 = vperm.slane %v68, 0
  %v78 = vunpack.c.l.b16 %v60
  %v79 = vunpack.c.l.b16 %v61
  %v80 = vunpack.c.l.b16 %v62
  %v81 = vunpack.c.l.b16 %v63
  %v82 = vunpack.c.l.b16 %v64
  %v83 = vunpack.c.l.b16 %v65
  %v84 = vunpack.c.l.b16 %v66
  %v85 = vunpack.c.l.b16 %v67
  %v86 = vpack.c.b16 %v79, %v78
  %v87 = vpack.c.b16 %v81, %v80
  %v88 = vpack.c.b16 %v83, %v82
  %v89 = vpack.c.b16 %v85, %v84
  %vm94 = vcmask 523264
  %v96 = vsel %vm94, %v59, 0
  %98 = vmatpush.bf16.msra.mxu0 0
  %99 = vmatpush.bf16.msra.mxu0 0
  %100 = vmatpush.bf16.msra.mxu0 0
  %101 = vmatpush.bf16.msra.mxu0 0
  %102 = vmatpush.bf16.msra.mxu0 %v89
  %103 = vmatpush.bf16.msra.mxu0 %v88
  %104 = vmatpush.bf16.msra.mxu0 %v87
  %105 = vmatpush.bf16.msra.mxu0 %v86
  %106 = vmatmul.bf16.gmra.mxu0 %v96
  %v107 = vpop.f32.mrf.mxu0
  %v108 = vadd.f32 %v69, %v107
  %v109 = vpop.f32.mrf.mxu0
  %v110 = vadd.f32 %v69, %v109
  %111 = vdwg.mxu0
  %v112 = vtanh.pop %v108
  %v113 = vtanh.pop %v110
  %v114 = vld [vmem:[%s3 + $0x2] sm:$0x1]
  %v115 = vld [vmem:[%s3 + $0x3] sm:$0x1]
  %v116 = vperm.slane %v114, 0
  %v117 = vmul.f32 %v112, %v116
  %v118 = vmul.f32 %v113, %v116
  %vm119 = vcmask 261120
  %v120 = vsel %vm119, %v117, 0.0
  %121 = vadd.xlane.f32.xlu0 %v120
  %v122 = vpop.xlane.xlu0 %121
  %v123 = vsel %vm119, %v118, 0.0
  %124 = vadd.xlane.f32.xlu0 %v123
  %v125 = vpop.xlane.xlu0 %124
  %v126 = vperm.slane %v115, 0
  %v127 = vadd.f32 %v122, %v126
  %v128 = vadd.f32 %v125, %v126
  %v129 = vxor.u32 %v127, 2147483648
  %v130 = vxor.u32 %v128, 2147483648
  %v131 = vmul.f32 %v129, 1.442695
  %v132 = vpow.pop %v131
  %v133 = vmul.f32 %v130, 1.442695
  %v134 = vpow.pop %v133
  %v135 = vadd.f32 %v132, 1.0
  %v136 = vadd.f32 %v134, 1.0
  %v137 = vrcp.pop %v135
  %v138 = vmul.f32 %v135, %v137
  %v139 = vsub.f32 1.0, %v138
  %v140 = vmul.f32 %v137, %v139
  %v141 = vadd.f32 %v137, %v140
  %vm142 = vweird.f32 %v135
  %vm143 = vweird.f32 %v137
  %vm144 = vmor %vm142, %vm143
  %v145 = vsel %vm144, %v137, %v141
  %v146 = vand.u32 2147483647, %v135
  %vm147 = vcmp.eq.f32.partialorder %v146, 8.507059e+37
  %v148 = vand.u32 %v135, 2147483648
  %v149 = vor.u32 1.1754944e-38, %v148
  %v150 = vsel %vm147, %v149, %v145
  %v151 = vmul.f32 1.0, %v150
  %v152 = vrcp.pop %v136
  %v153 = vmul.f32 %v136, %v152
  %v154 = vsub.f32 1.0, %v153
  %v155 = vmul.f32 %v152, %v154
  %v156 = vadd.f32 %v152, %v155
  %vm157 = vweird.f32 %v136
  %vm158 = vweird.f32 %v152
  %vm159 = vmor %vm157, %vm158
  %v160 = vsel %vm159, %v152, %v156
  %v161 = vand.u32 2147483647, %v136
  %vm162 = vcmp.eq.f32.partialorder %v161, 8.507059e+37
  %v163 = vand.u32 %v136, 2147483648
  %v164 = vor.u32 1.1754944e-38, %v163
  %v165 = vsel %vm162, %v164, %v160
  %v166 = vmul.f32 1.0, %v165
  %vm167 = vcmask 7168
  %168 = vst.msk [vmem:[%s4] sm:$0xff] %vm167, %v151
  %169 = vst.msk [vmem:[%s4 + $0x8] sm:$0xff] %vm167, %v166
  // Predicated region
  $region18: #{tpu_custom_call.1} parent=0 // pred_check
    _
  $region19: #{tpu_custom_call.1} parent=0 // pred_check_branch
    %171 = sbr.rel (0) target = $region21
  $region20: #{tpu_custom_call.1} parent=0 // pred_region
    _
  $region21: #{tpu_custom_call.1} parent=0 // pred_fallthru
    _
  // Predicated region
  $region22: #{tpu_custom_call.1} parent=0 // pred_check
    _
  $region23: #{tpu_custom_call.1} parent=0 // pred_check_branch
    %173 = sbr.rel (0) target = $region25
  $region24: #{tpu_custom_call.1} parent=0 // pred_region
    _
  $region25: #{tpu_custom_call.1} parent=0 // pred_fallthru
    _

</llo_original>
